<compile_context>
chip_gen: v6e
topology: v6e:2x2x1
jax: 0.10.0
libtpu: 0.0.40
codegen_flags: <defaults>
</compile_context>

<pallas_src>
import math

import jax
import jax.numpy as jnp
from jax.experimental import pallas as pl
from jax.experimental.pallas import tpu as pltpu


_MiB = 1024 * 1024


def _build_pe(d_model: int, max_len: int) -> jnp.ndarray:
    """Deterministic positional-encoding buffer, identical to the torch init."""
    position = jnp.arange(max_len, dtype=jnp.float32)[:, None]            # [max_len, 1]
    div_term = jnp.exp(
        jnp.arange(0, d_model, 2, dtype=jnp.float32) * (-math.log(10000.0) / d_model)
    )                                                                     # [d_model//2]
    pe = jnp.zeros((max_len, d_model), dtype=jnp.float32)
    pe = pe.at[:, 0::2].set(jnp.sin(position * div_term))
    pe = pe.at[:, 1::2].set(jnp.cos(position * div_term))
    return pe[None, :, :]                                                 # [1, max_len, d_model]


# -----------------------------------------------------------------------------
# Kernels
# -----------------------------------------------------------------------------

def _pe_add_kernel(x_ref, pe_ref, o_ref):
    # x_ref: (ts, tn); pe_ref: (1, tn) broadcasts over the seq-tile rows.
    # Explicit cast so a bf16 x with f32-promoted add still stores cleanly.
    o_ref[...] = (x_ref[...] + pe_ref[...]).astype(o_ref.dtype)


def _pe_outer_add_kernel(x_ref, pe_ref, o_ref):
    # batch==1 path: out[s, b, d] = x[s, 0, d] + pe[0, b, d] (outer sum).
    # x_ref: (ts, 1, D); pe_ref: (1, tb, D); o_ref: (ts, tb, D).
    o_ref[...] = (x_ref[...] + pe_ref[...]).astype(o_ref.dtype)


# -----------------------------------------------------------------------------
# Tile selection (generation aware)
# -----------------------------------------------------------------------------

def _chip_hint():
    """Returns (target_block_bytes, likely_multi_tensorcore).

    v7x-class chips (64 MiB VMEM/TC, ~3.2 TB/s HBM, 2 TCs) want bigger blocks
    so the ~0.35 us per-grid-step overhead stays negligible; the resulting
    footprint (~4 blocks + pe ~ 34 MiB) still fits their smaller VMEM.
    128-MiB-VMEM chips (v5e/v6e) are already near roofline at 4 MiB blocks.
    """
    try:
        vmem_cap = pltpu.get_tpu_info().vmem_capacity_bytes
    except Exception:
        return 4 * _MiB, False
    if vmem_cap <= 64 * _MiB:
        return 8 * _MiB, True
    return 4 * _MiB, False


def _sublane_multiple(itemsize: int) -> int:
    # f32 -> 8, bf16 -> 16, int8/fp8 -> 32 (sub-32-bit dtypes pack sublanes).
    return max(8, 32 // itemsize)


def _pick_tiles(seq_len: int, n: int, itemsize: int, target_block_bytes: int):
    """(ts, tn, sub) for the collapsed (seq_len, n) layout: lane-dense,
    dtype-aligned, favouring full contiguous rows."""
    sub = _sublane_multiple(itemsize)
    row_bytes = n * itemsize
    # Full rows => each block is one contiguous HBM slab and the pe row is
    # never re-fetched.  Allow whenever the minimal (sub x n) block stays
    # within ~max(target, 8 MiB); footprint 4*block + pe then stays < 64 MiB.
    if row_bytes * sub <= max(target_block_bytes, 8 * _MiB):
        tn = n
    else:
        lane_budget = max(target_block_bytes // sub, 128 * itemsize)
        tn = max(128, ((lane_budget // itemsize) // 128) * 128)
    ts_budget = max(sub, target_block_bytes // (tn * itemsize))
    if seq_len <= ts_budget:
        ts = seq_len
    else:
        ts = max(sub, (min(ts_budget, seq_len) // sub) * sub)
    return ts, tn, sub


# -----------------------------------------------------------------------------
# Forward
# -----------------------------------------------------------------------------

def _forward_batch1(x, pe2d, seq_len, max_len, d_model, itemsize, target):
    """batch==1 broadcast path: out[s, b, d] = x[s, 0, d] + pe[b, d].

    x stays un-broadcast (no seq*max_len*d_model HBM round-trip); its batch
    block index is pinned to 0 and the broadcast happens in-register.  Lane
    density here is d_model (full last dim) -- acceptable for this corner
    path, which is dominated by the output write anyway.
    """
    d_bytes = d_model * itemsize
    tb_budget = max(8, target // (8 * d_bytes))
    tb = max_len if max_len <= tb_budget else max(8, (tb_budget // 8) * 8)
    ts_budget = max(8, target // (tb * d_bytes))
    ts = seq_len if seq_len <= ts_budget else max(8, (ts_budget // 8) * 8)

    n_b = pl.cdiv(max_len, tb)
    n_seq = pl.cdiv(seq_len, ts)

    pe3 = pe2d[None]                                   # [1, max_len, d_model]

    out_block_bytes = ts * tb * d_bytes
    vmem_limit = 2 * out_block_bytes + 2 * (ts + tb) * d_bytes + 8 * _MiB
    vmem_limit = max(16 * _MiB, min(int(vmem_limit), 56 * _MiB))

    # Seq innermost: the (1, tb, D) pe block is constant over the inner loop;
    # only the tiny (ts, 1, D) x block is re-fetched.
    return pl.pallas_call(
        _pe_outer_add_kernel,
        out_shape=jax.ShapeDtypeStruct((seq_len, max_len, d_model), x.dtype),
        grid_spec=pltpu.PrefetchScalarGridSpec(
            num_scalar_prefetch=0,
            grid=(n_b, n_seq),
            in_specs=[
                pl.BlockSpec((ts, 1, d_model), lambda j, i: (i, 0, 0)),   # x (batch pinned)
                pl.BlockSpec((1, tb, d_model), lambda j, i: (0, j, 0)),   # pe
            ],
            out_specs=pl.BlockSpec((ts, tb, d_model), lambda j, i: (i, j, 0)),
        ),
        compiler_params=pltpu.CompilerParams(
            dimension_semantics=("parallel", "parallel"),
            vmem_limit_bytes=vmem_limit,
        ),
    )(x, pe3)


def positional_encoding_forward(x: jnp.ndarray, pe: jnp.ndarray, *, donate_x: bool = False):
    """x: [seq_len, batch, d_model]; pe: [1, max_len, d_model]."""
    seq_len, batch, d_model = x.shape
    pe_lead, max_len, pe_d = pe.shape
    assert pe_lead == 1 and pe_d == d_model, "pe must be [1, max_len, d_model]"
    assert seq_len >= 1, "seq_len must be >= 1"

    # Faithful torch broadcast of pe's max_len axis against x's batch axis.
    if batch == max_len or max_len == 1:
        b_out = batch
    elif batch == 1:
        b_out = max_len
    else:
        raise ValueError(
            f"PositionalEncoding broadcast requires batch == max_len (or one of "
            f"them == 1); got batch={batch}, max_len={max_len}"
        )

    itemsize = jnp.dtype(x.dtype).itemsize
    target, multi_core = _chip_hint()

    # pe participates at x.dtype (halves its DMA bytes for bf16 inputs).  Note:
    # torch would promote the add to f32; difference is one rounding step.
    pe2d = pe[0].astype(x.dtype)                       # [max_len, d_model]

    if batch == 1 and max_len != 1:
        if 64 * d_model * itemsize <= 16 * _MiB:
            return _forward_batch1(x, pe2d, seq_len, max_len, d_model, itemsize, target)
        # TODO(synk): absurdly wide d_model fallback materializes the broadcast.
        x = jnp.broadcast_to(x, (seq_len, max_len, d_model))
    elif max_len == 1 and batch != 1:
        pe2d = jnp.broadcast_to(pe2d, (batch, d_model))   # tiny: one output row

    # ---- main path: lane-dense collapse of (batch, d_model) ------------------
    n = b_out * d_model
    x2 = x.reshape(seq_len, n)                          # no-copy reshape
    pe_row = pe2d.reshape(1, n)

    ts, tn, sub = _pick_tiles(seq_len, n, itemsize, target)
    n_seq = pl.cdiv(seq_len, ts)
    n_lane = pl.cdiv(n, tn)

    # Guarantee a >=2-extent parallel axis when everything fits one block, so a
    # 2-TensorCore chip (v7x) shards the work.  Seq split keeps rows contiguous
    # and costs only one extra ~0.35 us step on single-core chips; the lane
    # split (strided blocks) is only worth it on multi-core chips.
    if n_seq * n_lane == 1:
        if seq_len >= 2 * sub:
            half = (seq_len + 1) // 2
            ts = min(seq_len, ((half + sub - 1) // sub) * sub)
            n_seq = pl.cdiv(seq_len, ts)
        elif multi_core and n >= 256:
            half = (n + 1) // 2
            tn = min(n, ((half + 127) // 128) * 128)
            n_lane = pl.cdiv(n, tn)

    if n_lane > 1:
        # Lane axis outermost: pe's block index (0, j) is constant over the
        # inner seq loop, so the (1, tn) pe row is not re-DMA'd every step.
        grid = (n_lane, n_seq)
        x_spec = pl.BlockSpec((ts, tn), lambda j, i: (i, j))
        pe_spec = pl.BlockSpec((1, tn), lambda j, i: (0, j))
        out_spec = pl.BlockSpec((ts, tn), lambda j, i: (i, j))
    else:
        grid = (n_seq, n_lane)
        x_spec = pl.BlockSpec((ts, tn), lambda i, j: (i, j))
        pe_spec = pl.BlockSpec((1, tn), lambda i, j: (0, j))
        out_spec = pl.BlockSpec((ts, tn), lambda i, j: (i, j))

    # VMEM budget from the actual tile footprint:
    # 2x(x block) + 2x(out block) double-buffered + 2x(pe row) + headroom.
    block_bytes = ts * tn * itemsize
    vmem_limit = 4 * block_bytes + 2 * tn * itemsize + 8 * _MiB
    vmem_limit = max(16 * _MiB, min(int(vmem_limit), 56 * _MiB))

    # NOTE: if a v7x profile shows exposed input DMA at these short steps, the
    # x in_spec can additionally take pipeline_mode=pl.Buffered(3).
    out2 = pl.pallas_call(
        _pe_add_kernel,
        out_shape=jax.ShapeDtypeStruct((seq_len, n), x.dtype),
        grid_spec=pltpu.PrefetchScalarGridSpec(
            num_scalar_prefetch=0,
            grid=grid,
            in_specs=[x_spec, pe_spec],
            out_specs=out_spec,
        ),
        compiler_params=pltpu.CompilerParams(
            # Purely element-wise streaming add: every axis is parallel.
            dimension_semantics=("parallel", "parallel"),
            vmem_limit_bytes=vmem_limit,
        ),
        # Reuse x's HBM buffer for the output when the caller donates x.
        input_output_aliases={0: 0} if donate_x else {},
    )(x2, pe_row)

    return out2.reshape(seq_len, b_out, d_model)


if __name__ == "__main__":
    key = jax.random.PRNGKey(0)

    # ---- main path: batch == max_len (the only quirk-compatible common case) --
    seq_len, batch, d_model = 8, 8, 32
    max_len = 8
    pe = _build_pe(d_model=d_model, max_len=max_len)
    x = jax.random.normal(key, (seq_len, batch, d_model), dtype=jnp.float32)

    ref = x + pe[:seq_len]                               # plain-JAX reference
    out = positional_encoding_forward(x, pe)
    out = jax.block_until_ready(out)
    assert out.shape == (seq_len, batch, d_model)
    assert jnp.allclose(out, ref, atol=1e-6), "mismatch vs reference (main path)"

    # ---- batch == 1 broadcast path (x replicated along pe's max_len axis) -----
    seq_len1, max_len1, d_model1 = 8, 16, 32
    pe1 = _build_pe(d_model=d_model1, max_len=max_len1)
    x1 = jax.random.normal(jax.random.PRNGKey(0), (seq_len1, 1, d_model1), dtype=jnp.float32)

    ref1 = x1 + pe1[:seq_len1]
    out1 = positional_encoding_forward(x1, pe1)
    out1 = jax.block_until_ready(out1)
    assert out1.shape == (seq_len1, max_len1, d_model1)
    assert jnp.allclose(out1, ref1, atol=1e-6), "mismatch vs reference (batch==1 path)"

    print("KERNEL_OK")
</pallas_src>

<mosaic_0001>
module attributes {stable_mosaic.version = 11 : i64} {
  func.func @_pe_add_kernel(%arg0: i32, %arg1: i32, %arg2: memref<8x256xf32, #tpu.memory_space<vmem>>, %arg3: memref<1x256xf32, #tpu.memory_space<vmem>>, %arg4: memref<8x256xf32, #tpu.memory_space<vmem>>) attributes {dimension_semantics = [#tpu.dimension_semantics<parallel>, #tpu.dimension_semantics<parallel>], iteration_bounds = array<i64: 1, 1>, scalar_prefetch = 0 : i64, scratch_operands = 0 : i64, tpu.core_type = #tpu.core_type<tc>, window_params = [{transform_indices = @transform_0, window_bounds = array<i64: 8, 256>}, {transform_indices = @transform_1, window_bounds = array<i64: 1, 256>}, {transform_indices = @transform_2, window_bounds = array<i64: 8, 256>}]} {
    %c0 = arith.constant 0 : index
    %c0_0 = arith.constant 0 : index
    %0 = vector.load %arg2[%c0, %c0_0] : memref<8x256xf32, #tpu.memory_space<vmem>>, vector<8x256xf32>
    %c0_1 = arith.constant 0 : index
    %c0_2 = arith.constant 0 : index
    %1 = vector.load %arg3[%c0_1, %c0_2] : memref<1x256xf32, #tpu.memory_space<vmem>>, vector<1x256xf32>
    %2 = vector.broadcast %1 : vector<1x256xf32> to vector<8x256xf32>
    %3 = arith.addf %0, %2 : vector<8x256xf32>
    %c0_3 = arith.constant 0 : index
    %c0_4 = arith.constant 0 : index
    %4 = vector.load %arg4[%c0_3, %c0_4] : memref<8x256xf32, #tpu.memory_space<vmem>>, vector<8x256xf32>
    tpu.vector_store %arg4[%c0_3, %c0_4], %3 {strides = array<i32>} : memref<8x256xf32, #tpu.memory_space<vmem>>, vector<8x256xf32>,
    return
  }
  func.func @transform_0(%arg0: i32, %arg1: i32) -> (i32, i32) {
    %c0_i32 = arith.constant 0 : i32
    return %arg0, %arg1 : i32, i32
  }
  func.func @transform_1(%arg0: i32, %arg1: i32) -> (i32, i32) {
    %c0_i32 = arith.constant 0 : i32
    %c0_i32_0 = arith.constant 0 : i32
    return %c0_i32, %arg1 : i32, i32
  }
  func.func @transform_2(%arg0: i32, %arg1: i32) -> (i32, i32) {
    %c0_i32 = arith.constant 0 : i32
    return %arg0, %arg1 : i32, i32
  }
}

</mosaic_0001>

<llo_original>
// kernel: tpu_custom_call.1
$region0: #{tpu_custom_call.1}
  #allocation0 [shape = 'u32[]', space=smem, size = 0x4, offset = 0x4, fixed_abs, tag = 'smem constant byte address 0x4 - core index']
  #allocation1 [shape = 'u32[144,128]{1,0:T(1,128)}', space=vmem, size = 0x12000, scoped, tag = 'internal scratch']
  %s0 = inlined_call_operand.hbm [shape: f32[8,256], index: 0, kind: input, shape index: {}]
  %s1 = inlined_call_operand.hbm [shape: f32[1,256], index: 1, kind: input, shape index: {}]
  %s2 = inlined_call_operand.hbm [shape: f32[8,256], index: 2, kind: output, shape index: {}]
  %s3 = sld [smem:[#allocation0]]
  $region26: #{tpu_custom_call.1} parent=0
    _
  %s5 = ssub.s32 1, %s3
  %s6 = scalar_select 0, %s5, %s3
  $region1: #{tpu_custom_call.1} parent=0
    #allocation2 [shape = 'u8[8192]{0}', space=vmem, size = 0x2000, scoped, tag = 'input window, operand 0, single buffered']
    #allocation3 [shape = 's32[1]{0}', space=sflag, size = 0x4, scoped, tag = 'scoped memory for tpu_custom_call.1']
    #allocation4 [shape = 's32[1]{0}', space=sflag, size = 0x4, scoped, tag = 'scoped memory for tpu_custom_call.1']
    #allocation5 [shape = 'u8[1024]{0}', space=vmem, size = 0x400, scoped, tag = 'input window, operand 1, single buffered']
    #allocation6 [shape = 's32[1]{0}', space=sflag, size = 0x4, scoped, tag = 'scoped memory for tpu_custom_call.1']
    #allocation7 [shape = 'u8[8192]{0}', space=vmem, size = 0x2000, scoped, tag = 'output window, operand 0, single buffered']
    %7 = vsyncpa [#allocation3], 0
    %8 = vsyncpa [#allocation6], 0
    %9 = vsyncpa [#allocation4], 0
    // Predicated region
    $region2: #{tpu_custom_call.1} parent=1 // pred_check
      _
    $region3: #{tpu_custom_call.1} parent=1 // pred_check_branch
      %11 = sbr.rel (0) target = $region5
    $region4: #{tpu_custom_call.1} parent=1 // pred_region
      %s13 = ssub.s32 256, 256
      %14 = vsyncadd [#allocation3], %s13
      %s16 = sshll.u32 [#allocation2], 4
      %s17 = int_to_ptr.vmem [resolvable:$true] %s16
      %19 = dma.hbm_to_vmem [thread:$0]  %s0, 256, %s17, [#allocation3]
    $region5: #{tpu_custom_call.1} parent=1 // pred_fallthru
      _
    // Predicated region
    $region6: #{tpu_custom_call.1} parent=1 // pred_check
      _
    $region7: #{tpu_custom_call.1} parent=1 // pred_check_branch
      %21 = sbr.rel (0) target = $region9
    $region8: #{tpu_custom_call.1} parent=1 // pred_region
      %s23 = ssub.s32 32, 32
      %24 = vsyncadd [#allocation6], %s23
      %s26 = sshll.u32 [#allocation5], 4
      %s27 = int_to_ptr.vmem [resolvable:$true] %s26
      %29 = dma.hbm_to_vmem [thread:$0]  %s1, 32, %s27, [#allocation6]
    $region9: #{tpu_custom_call.1} parent=1 // pred_fallthru
      _
    // Predicated region
    $region10: #{tpu_custom_call.1} parent=1 // pred_check
      _
    $region11: #{tpu_custom_call.1} parent=1 // pred_check_branch
      %31 = sbr.rel (0) target = $region13
    $region12: #{tpu_custom_call.1} parent=1 // pred_region
      %32 = dma.done [#allocation3], 256
    $region13: #{tpu_custom_call.1} parent=1 // pred_fallthru
      _
    // Predicated region
    $region14: #{tpu_custom_call.1} parent=1 // pred_check
      _
    $region15: #{tpu_custom_call.1} parent=1 // pred_check_branch
      %34 = sbr.rel (0) target = $region17
    $region16: #{tpu_custom_call.1} parent=1 // pred_region
      %35 = dma.done [#allocation6], 32
    $region17: #{tpu_custom_call.1} parent=1 // pred_fallthru
      _
    %v36 = vld [vmem:[#allocation2] sm:$0xff]
    %v37 = vld [vmem:[#allocation2 + $0x8] sm:$0xff]
    %v38 = vld [vmem:[#allocation5] sm:$0x3]
    %v40 = vlaneseq
    %v41 = vshrl.u32 %v40, 7
    %v42 = vsub.s32 0, %v41
    %v43 = vrot.slane %v38, %v42
    %v44 = vlaneseq
    %v45 = vshrl.u32 %v44, 7
    %v46 = vsub.s32 1, %v45
    %v47 = vrot.slane %v38, %v46
    %v50 = vadd.f32 %v36, %v43
    %v51 = vadd.f32 %v37, %v47
    %52 = vst [vmem:[#allocation7] sm:$0xff] %v50
    %53 = vst [vmem:[#allocation7 + $0x8] sm:$0xff] %v51
    // Predicated region
    $region18: #{tpu_custom_call.1} parent=1 // pred_check
      _
    $region19: #{tpu_custom_call.1} parent=1 // pred_check_branch
      %55 = sbr.rel (0) target = $region21
    $region20: #{tpu_custom_call.1} parent=1 // pred_region
      %s57 = ssub.s32 256, 256
      %58 = vsyncadd [#allocation4], %s57
      %s60 = sshll.u32 [#allocation7], 4
      %s61 = int_to_ptr.vmem [resolvable:$true] %s60
      %63 = dma.vmem_to_hbm [thread:$0]  %s61, 256, %s2, [#allocation4]
    $region21: #{tpu_custom_call.1} parent=1 // pred_fallthru
      _
    // Predicated region
    $region22: #{tpu_custom_call.1} parent=1 // pred_check
      _
    $region23: #{tpu_custom_call.1} parent=1 // pred_check_branch
      %65 = sbr.rel (0) target = $region25
    $region24: #{tpu_custom_call.1} parent=1 // pred_region
      %66 = dma.done [#allocation4], 256
    $region25: #{tpu_custom_call.1} parent=1 // pred_fallthru
      _
    %67 = vsyncpa [#allocation3], 1
    %68 = vsyncpa [#allocation6], 1
    %69 = vsyncpa [#allocation4], 1

</llo_original>
